<compile_context>
chip_gen: v7x
topology: tpu7x:2x2x1
jax: 0.10.0
libtpu: 0.0.40
codegen_flags: <defaults>
</compile_context>

<pallas_src>
import jax
import jax.numpy as jnp
from jax.experimental import pallas as pl
from jax.experimental.pallas import tpu as pltpu

LANE = 128


def _round_up(a, b):
    return (a + b - 1) // b * b


# ----------------------------- kernels --------------------------------------

def stats_kernel(x_ref, w_ref, psum_ref, psq_ref):
    """Per-block partial sum / sum-of-squares of z = W @ x (the 1x1x1 conv)."""
    z = jnp.dot(w_ref[...], x_ref[...],                  # (Cout,Cin)@(Cin,tile_s)
                preferred_element_type=jnp.float32)      # -> (Cout, tile_s)
    psum_ref[...] = jnp.sum(z, axis=1, keepdims=True)    # (Cout, 1)
    psq_ref[...] = jnp.sum(z * z, axis=1, keepdims=True)  # (Cout, 1)


def conv_bn_relu_kernel(x_ref, w_ref, scale_ref, shift_ref, o_ref):
    """Fused 1x1x1 conv recompute + batch-norm affine + ReLU (lane-dense out)."""
    z = jnp.dot(w_ref[...], x_ref[...],                  # (Cout, tile_s)
                preferred_element_type=jnp.float32)
    o_ref[...] = jnp.maximum(z * scale_ref[...] + shift_ref[...], 0.0)


# ----------------------------- wrapper ---------------------------------------

def conv_1x1x1_forward(x, weight, bias, gamma, beta, *, eps=1e-5, max_tile_s=4096):
    """x: (N, Cin, D, H, W) f32.  weight: (Cout, Cin).  bias/gamma/beta: (Cout,).

    `bias` is accepted for API parity with nn.Conv3d(bias=True) but unused:
    conv bias followed by training-mode BatchNorm is mathematically a no-op.
    """
    del bias
    N, Cin, D, H, W = x.shape
    Cout = weight.shape[0]
    S = D * H * W
    M = N * S                                     # true voxel count for BN stats

    # Voxels on the lane axis; big tiles (mem-bound op).  Pad S to a multiple
    # of tile_s with zeros (zeros add 0 to sum(z)/sum(z^2); we divide by the
    # true M, and padded output lanes are sliced off at the end).
    tile_s = min(max_tile_s, _round_up(S, LANE))
    S_pad = _round_up(S, tile_s)
    x3 = x.reshape(N, Cin, S).astype(jnp.float32)
    if S_pad != S:
        x3 = jnp.pad(x3, ((0, 0), (0, 0), (0, S_pad - S)))
    nsb = S_pad // tile_s
    grid = (N, nsb)

    w = weight.astype(jnp.float32)                # (Cout, Cin)

    # VMEM footprint per step is (Cin + Cout) * tile_s * 4B (double-buffered),
    # well under every generation's limit at these channel counts.  For much
    # larger Cin/Cout, shrink max_tile_s (v7x: 64 MiB VMEM/core; v5e scoped
    # default is 16 MiB) — 32 MiB scoped limit is safe on all generations.
    cparams = pltpu.CompilerParams(
        dimension_semantics=("parallel", "parallel"),
        vmem_limit_bytes=32 * 1024 * 1024,
    )

    # ---- Pass 1: per-block partial BN statistics of z = W @ x --------------
    psum, psq = pl.pallas_call(
        stats_kernel,
        out_shape=(
            jax.ShapeDtypeStruct((N, nsb, Cout, 1), jnp.float32),
            jax.ShapeDtypeStruct((N, nsb, Cout, 1), jnp.float32),
        ),
        grid_spec=pltpu.PrefetchScalarGridSpec(
            num_scalar_prefetch=0,
            grid=grid,
            in_specs=[
                pl.BlockSpec((None, Cin, tile_s), lambda n, j: (n, 0, j)),
                pl.BlockSpec((Cout, Cin), lambda n, j: (0, 0)),
            ],
            out_specs=[
                pl.BlockSpec((None, None, Cout, 1), lambda n, j: (n, j, 0, 0)),
                pl.BlockSpec((None, None, Cout, 1), lambda n, j: (n, j, 0, 0)),
            ],
        ),
        compiler_params=cparams,
    )(x3, w)

    # ---- Tiny final reduction + BN affine coefficients (plain JAX) ---------
    sum_z = jnp.sum(psum, axis=(0, 1)).reshape(Cout)
    sum_z2 = jnp.sum(psq, axis=(0, 1)).reshape(Cout)
    mean = sum_z / M
    var = jnp.maximum(sum_z2 / M - mean * mean, 0.0)   # clamp: cancellation guard
    inv_std = jax.lax.rsqrt(var + eps)
    scale = gamma.astype(jnp.float32) * inv_std        # (Cout,)
    shift = beta.astype(jnp.float32) - mean * scale    # (Cout,)
    scale2 = scale.reshape(Cout, 1)
    shift2 = shift.reshape(Cout, 1)

    # ---- Pass 2: fused conv recompute + BN + ReLU, lane-dense output -------
    out3 = pl.pallas_call(
        conv_bn_relu_kernel,
        out_shape=jax.ShapeDtypeStruct((N, Cout, S_pad), jnp.float32),
        grid_spec=pltpu.PrefetchScalarGridSpec(
            num_scalar_prefetch=0,
            grid=grid,
            in_specs=[
                pl.BlockSpec((None, Cin, tile_s), lambda n, j: (n, 0, j)),
                pl.BlockSpec((Cout, Cin), lambda n, j: (0, 0)),
                pl.BlockSpec((Cout, 1), lambda n, j: (0, 0)),
                pl.BlockSpec((Cout, 1), lambda n, j: (0, 0)),
            ],
            out_specs=pl.BlockSpec((None, Cout, tile_s), lambda n, j: (n, 0, j)),
        ),
        compiler_params=cparams,
    )(x3, w, scale2, shift2)

    if S_pad != S:
        out3 = out3[:, :, :S]
    return out3.reshape(N, Cout, D, H, W)          # already NCDHW — no transpose


# Pure-JAX reference (same math) for a sanity check.
def conv_1x1x1_ref(x, weight, bias, gamma, beta, eps=1e-5):
    N, Cin, D, H, W = x.shape
    Cout = weight.shape[0]
    x2d = jnp.transpose(x, (0, 2, 3, 4, 1)).reshape(-1, Cin)
    y = x2d @ weight.T + bias[None, :]
    mean = y.mean(axis=0, keepdims=True)
    var = y.var(axis=0, keepdims=True)
    yhat = (y - mean) / jnp.sqrt(var + eps)
    out = jnp.maximum(yhat * gamma[None, :] + beta[None, :], 0.0)
    return jnp.transpose(out.reshape(N, D, H, W, Cout), (0, 4, 1, 2, 3))


if __name__ == "__main__":
    key = jax.random.PRNGKey(0)
    k_x, k_w, k_b, k_g, k_be = jax.random.split(key, 5)

    in_dim, out_dim = 4, 8
    N, D, H, W = 2, 4, 8, 8          # S = 256 voxels per sample, M = 512

    x = jax.random.normal(k_x, (N, in_dim, D, H, W), dtype=jnp.float32)
    # Conv3d 1x1x1 weight -> (Cout, Cin), bias (Cout,)
    weight = jax.random.normal(k_w, (out_dim, in_dim), dtype=jnp.float32) * 0.1
    bias = jax.random.normal(k_b, (out_dim,), dtype=jnp.float32) * 0.1
    # SynchronizedBatchNorm3d affine params
    gamma = 1.0 + 0.1 * jax.random.normal(k_g, (out_dim,), dtype=jnp.float32)
    beta = 0.1 * jax.random.normal(k_be, (out_dim,), dtype=jnp.float32)

    out = conv_1x1x1_forward(x, weight, bias, gamma, beta)
    out = jax.block_until_ready(out)

    ref = conv_1x1x1_ref(x, weight, bias, gamma, beta)
    assert out.shape == (N, out_dim, D, H, W)
    assert jnp.allclose(out, ref, atol=1e-4, rtol=1e-4), "mismatch vs reference"

    print("KERNEL_OK")
</pallas_src>

<mosaic_0001>
module attributes {stable_mosaic.version = 11 : i64} {
  func.func @stats_kernel(%arg0: i32, %arg1: i32, %arg2: memref<1x4x256xf32, #tpu.memory_space<vmem>>, %arg3: memref<8x4xf32, #tpu.memory_space<vmem>>, %arg4: memref<1x1x8x1xf32, #tpu.memory_space<vmem>>, %arg5: memref<1x1x8x1xf32, #tpu.memory_space<vmem>>) attributes {dimension_semantics = [#tpu.dimension_semantics<parallel>, #tpu.dimension_semantics<parallel>], iteration_bounds = array<i64: 2, 1>, scalar_prefetch = 0 : i64, scratch_operands = 0 : i64, tpu.core_type = #tpu.core_type<tc>, window_params = [{transform_indices = @transform_0, window_bounds = array<i64: 1, 4, 256>}, {pipeline_mode = #tpu.pipeline_mode<synchronous>, transform_indices = @transform_1, window_bounds = array<i64: 8, 4>}, {transform_indices = @transform_2, window_bounds = array<i64: 1, 1, 8, 1>}, {transform_indices = @transform_3, window_bounds = array<i64: 1, 1, 8, 1>}]} {
    %c0 = arith.constant 0 : index
    %c0_0 = arith.constant 0 : index
    %0 = vector.load %arg3[%c0, %c0_0] : memref<8x4xf32, #tpu.memory_space<vmem>>, vector<8x4xf32>
    %c0_1 = arith.constant 0 : index
    %c0_2 = arith.constant 0 : index
    %c0_3 = arith.constant 0 : index
    %1 = vector.load %arg2[%c0_1, %c0_2, %c0_3] : memref<1x4x256xf32, #tpu.memory_space<vmem>>, vector<1x4x256xf32>
    %2 = vector.shape_cast %1 : vector<1x4x256xf32> to vector<4x256xf32>
    %cst = arith.constant dense<0.000000e+00> : vector<8x256xf32>
    %3 = tpu.matmul %0, %2, %cst {dimension_numbers = #tpu.dot_dimension_numbers<[1], [0], [0], [1], [0, 0, 1, 1], [], []>} : vector<8x4xf32>, vector<4x256xf32>, vector<8x256xf32> -> vector<8x256xf32>
    %cst_4 = arith.constant dense<0.000000e+00> : vector<8xf32>
    %4 = vector.multi_reduction <add>, %3, %cst_4 [1] : vector<8x256xf32> to vector<8xf32>
    %5 = vector.shape_cast %4 : vector<8xf32> to vector<8x1xf32>
    %c0_5 = arith.constant 0 : index
    %c0_6 = arith.constant 0 : index
    %c0_7 = arith.constant 0 : index
    %c0_8 = arith.constant 0 : index
    %6 = vector.load %arg4[%c0_5, %c0_6, %c0_7, %c0_8] : memref<1x1x8x1xf32, #tpu.memory_space<vmem>>, vector<1x1x8x1xf32>
    %7 = vector.shape_cast %6 : vector<1x1x8x1xf32> to vector<8x1xf32>
    %8 = vector.shape_cast %5 : vector<8x1xf32> to vector<1x1x8x1xf32>
    tpu.vector_store %arg4[%c0_5, %c0_6, %c0_7, %c0_8], %8 {strides = array<i32>} : memref<1x1x8x1xf32, #tpu.memory_space<vmem>>, vector<1x1x8x1xf32>,
    %9 = arith.mulf %3, %3 : vector<8x256xf32>
    %cst_9 = arith.constant dense<0.000000e+00> : vector<8xf32>
    %10 = vector.multi_reduction <add>, %9, %cst_9 [1] : vector<8x256xf32> to vector<8xf32>
    %11 = vector.shape_cast %10 : vector<8xf32> to vector<8x1xf32>
    %c0_10 = arith.constant 0 : index
    %c0_11 = arith.constant 0 : index
    %c0_12 = arith.constant 0 : index
    %c0_13 = arith.constant 0 : index
    %12 = vector.load %arg5[%c0_10, %c0_11, %c0_12, %c0_13] : memref<1x1x8x1xf32, #tpu.memory_space<vmem>>, vector<1x1x8x1xf32>
    %13 = vector.shape_cast %12 : vector<1x1x8x1xf32> to vector<8x1xf32>
    %14 = vector.shape_cast %11 : vector<8x1xf32> to vector<1x1x8x1xf32>
    tpu.vector_store %arg5[%c0_10, %c0_11, %c0_12, %c0_13], %14 {strides = array<i32>} : memref<1x1x8x1xf32, #tpu.memory_space<vmem>>, vector<1x1x8x1xf32>,
    return
  }
  func.func @transform_0(%arg0: i32, %arg1: i32) -> (i32, i32, i32) {
    %c0_i32 = arith.constant 0 : i32
    %c0_i32_0 = arith.constant 0 : i32
    return %arg0, %c0_i32, %arg1 : i32, i32, i32
  }
  func.func @transform_1(%arg0: i32, %arg1: i32) -> (i32, i32) {
    %c0_i32 = arith.constant 0 : i32
    %c0_i32_0 = arith.constant 0 : i32
    %c0_i32_1 = arith.constant 0 : i32
    return %c0_i32, %c0_i32_0 : i32, i32
  }
  func.func @transform_2(%arg0: i32, %arg1: i32) -> (i32, i32, i32, i32) {
    %c0_i32 = arith.constant 0 : i32
    %c0_i32_0 = arith.constant 0 : i32
    %c0_i32_1 = arith.constant 0 : i32
    return %arg0, %arg1, %c0_i32, %c0_i32_0 : i32, i32, i32, i32
  }
  func.func @transform_3(%arg0: i32, %arg1: i32) -> (i32, i32, i32, i32) {
    %c0_i32 = arith.constant 0 : i32
    %c0_i32_0 = arith.constant 0 : i32
    %c0_i32_1 = arith.constant 0 : i32
    return %arg0, %arg1, %c0_i32, %c0_i32_0 : i32, i32, i32, i32
  }
}

</mosaic_0001>

<llo_original>
// kernel: tpu_custom_call.1
$region0: #{tpu_custom_call.1}
  #allocation0 [shape = 'u32[]', space=smem, size = 0x4, offset = 0x4, fixed_abs, tag = 'smem constant byte address 0x4 - core index']
  #allocation1 [shape = 'u32[144,128]{1,0:T(1,128)}', space=vmem, size = 0x12000, scoped, tag = 'internal scratch']
  %s0 = inlined_call_operand.hbm [shape: f32[2,4,256], index: 0, kind: input, shape index: {}]
  %s1 = inlined_call_operand.vmem [shape: f32[8,4], index: 1, kind: input, shape index: {}]
  %s2 = inlined_call_operand.vmem [shape: f32[2,1,8,1], index: 2, kind: output, shape index: {0}]
  %s3 = inlined_call_operand.vmem [shape: f32[2,1,8,1], index: 3, kind: output, shape index: {1}]
  %4 = xla_tuple %s2, %s3
  %s5 = sld [smem:[#allocation0]]
  $region53: #{tpu_custom_call.1} parent=0
    _
  %s7 = ssub.s32 1, %s5
  %s8 = scalar_select 0, %s7, %s5
  $region1: #{tpu_custom_call.1} parent=0
    #allocation2 [shape = 'u8[8192]{0}', space=vmem, size = 0x2000, scoped, tag = 'input window, operand 0']
    #allocation3 [shape = 's32[2]{0}', space=sflag, size = 0x8, scoped, tag = 'scoped memory for tpu_custom_call.1']
    %9 = vsyncpa [#allocation3], 0
    %s10 = scalar_lea.sflag [#allocation3], 1
    %11 = vsyncpa %s10, 0
    loop: start=0, step=1, limit=4
    $region2: #{tpu_custom_call.1} parent=1 // loop_pre_header
      _
    $region3: #{tpu_custom_call.1} parent=1 // loop_header
      %s13 = sphi 0, %s17
      %p14 = scmp.ge.s32.totalorder %s13, 4
      %s20 = sphi 0, %s32
      %s21 = sphi 0, %s28
      %s22 = sphi 0, %s20
      %s23 = sphi 0, %s21
      %s24 = sphi 0, %s22
      %s25 = sphi 0, %s23
      %s37 = sphi 0, %s39
      %s40 = sphi 0, %s37
      %s41 = sphi 0, %s40
      %s57 = sphi 0, %s41
      %s61 = sphi 0, %s61
      %s63 = sphi 0, %s61
      %s64 = sphi 0, %s63
      %s78 = sphi 0, %s64
      %s86 = sphi 0, %s88
      %s89 = sphi 0, %s86
      %s90 = sphi 0, %s89
      %s106 = sphi 0, %s90
      %s114 = sphi 0, %s116
      %s117 = sphi 0, %s114
      %s118 = sphi 0, %s117
      %s134 = sphi 0, %s118
    $region4: #{tpu_custom_call.1} parent=1 // loop_header_branch
      %16 = sbr.rel (%p14) target = $region8
    $region5: #{tpu_custom_call.1} parent=1 // loop_body
      %s18 = ssub.s32 %s13, 1
      %s19 = ssub.s32 %s13, 2
      %s26 = sadd.s32 1, %s21
      %p27 = scmp.ge.s32.totalorder %s26, 1
      %s28 = scalar_select %p27, 0, %s26
      %s29 = sadd.s32 1, %s20
      %s30 = scalar_select %p27, %s29, %s20
      %p31 = scmp.ge.s32.totalorder %s30, 2
      %s32 = scalar_select %p31, 0, %s30
      %s33 = ssub.s32 %s20, %s32
      %s34 = ssub.s32 %s21, %s28
      %s35 = sor.u32 %s33, %s34
      %p36 = scmp.eq.s32.totalorder %s35, 0
      %s38 = sadd.s32 %s37, 1
      %s39 = scalar_select %p36, %s37, %s38
      %p42 = pneg %p36
      %p43 = scmp.eq.s32.totalorder %s13, 1
      %p44 = por %p42, %p43
      %p45 = scmp.ne.s32.totalorder %s37, %s40
      %p46 = scmp.eq.s32.totalorder %s13, 0
      %p47 = por %p45, %p46
      %p48 = scmp.ne.s32.totalorder %s37, %s40
      %p49 = scmp.eq.s32.totalorder %s18, 1
      %p50 = por %p48, %p49
      %p51 = scmp.ne.s32.totalorder %s40, %s41
      %p52 = scmp.eq.s32.totalorder %s18, 0
      %p53 = por %p51, %p52
      %p54 = scmp.ne.s32.totalorder %s40, %s41
      %p55 = scmp.eq.s32.totalorder %s19, 1
      %p56 = por %p54, %p55
      %p58 = scmp.ne.s32.totalorder %s41, %s57
      %p59 = scmp.eq.s32.totalorder %s19, 0
      %p60 = por %p58, %p59
      %s62 = sadd.s32 %s61, 1
      %p65 = scmp.eq.s32.totalorder %s13, 1
      %p66 = scmp.ne.s32.totalorder %s61, %s63
      %p67 = scmp.eq.s32.totalorder %s13, 0
      %p68 = por %p66, %p67
      %p69 = scmp.ne.s32.totalorder %s61, %s63
      %p70 = scmp.eq.s32.totalorder %s18, 1
      %p71 = por %p69, %p70
      %p72 = scmp.ne.s32.totalorder %s63, %s64
      %p73 = scmp.eq.s32.totalorder %s18, 0
      %p74 = por %p72, %p73
      %p75 = scmp.ne.s32.totalorder %s63, %s64
      %p76 = scmp.eq.s32.totalorder %s19, 1
      %p77 = por %p75, %p76
      %p79 = scmp.ne.s32.totalorder %s64, %s78
      %p80 = scmp.eq.s32.totalorder %s19, 0
      %p81 = por %p79, %p80
      %s82 = ssub.s32 %s20, %s32
      %s83 = ssub.s32 %s21, %s28
      %s84 = sor.u32 %s82, %s83
      %p85 = scmp.eq.s32.totalorder %s84, 0
      %s87 = sadd.s32 %s86, 1
      %s88 = scalar_select %p85, %s86, %s87
      %p91 = pneg %p85
      %p92 = scmp.eq.s32.totalorder %s13, 1
      %p93 = por %p91, %p92
      %p94 = scmp.ne.s32.totalorder %s86, %s89
      %p95 = scmp.eq.s32.totalorder %s13, 0
      %p96 = por %p94, %p95
      %p97 = scmp.ne.s32.totalorder %s86, %s89
      %p98 = scmp.eq.s32.totalorder %s18, 1
      %p99 = por %p97, %p98
      %p100 = scmp.ne.s32.totalorder %s89, %s90
      %p101 = scmp.eq.s32.totalorder %s18, 0
      %p102 = por %p100, %p101
      %p103 = scmp.ne.s32.totalorder %s89, %s90
      %p104 = scmp.eq.s32.totalorder %s19, 1
      %p105 = por %p103, %p104
      %p107 = scmp.ne.s32.totalorder %s90, %s106
      %p108 = scmp.eq.s32.totalorder %s19, 0
      %p109 = por %p107, %p108
      %s110 = ssub.s32 %s20, %s32
      %s111 = ssub.s32 %s21, %s28
      %s112 = sor.u32 %s110, %s111
      %p113 = scmp.eq.s32.totalorder %s112, 0
      %s115 = sadd.s32 %s114, 1
      %s116 = scalar_select %p113, %s114, %s115
      %p119 = pneg %p113
      %p120 = scmp.eq.s32.totalorder %s13, 1
      %p121 = por %p119, %p120
      %p122 = scmp.ne.s32.totalorder %s114, %s117
      %p123 = scmp.eq.s32.totalorder %s13, 0
      %p124 = por %p122, %p123
      %p125 = scmp.ne.s32.totalorder %s114, %s117
      %p126 = scmp.eq.s32.totalorder %s18, 1
      %p127 = por %p125, %p126
      %p128 = scmp.ne.s32.totalorder %s117, %s118
      %p129 = scmp.eq.s32.totalorder %s18, 0
      %p130 = por %p128, %p129
      %p131 = scmp.ne.s32.totalorder %s117, %s118
      %p132 = scmp.eq.s32.totalorder %s19, 1
      %p133 = por %p131, %p132
      %p135 = scmp.ne.s32.totalorder %s118, %s134
      %p136 = scmp.eq.s32.totalorder %s19, 0
      %p137 = por %p135, %p136
      %p138 = scmp.le.s32.totalorder 1, %s13
      %p139 = scmp.lt.s32.totalorder %s13, 3
      %p140 = pnand %p138, %p139
      %p141 = pneg %p140
      // Predicated region
      $region9: #{tpu_custom_call.1} parent=5 // pred_check
        _
      $region10: #{tpu_custom_call.1} parent=5 // pred_check_branch
        %143 = sbr.rel (%p140) target = $region12
      $region11: #{tpu_custom_call.1} parent=5 // pred_region
        %s144 = ssub.s32 %s13, 1
        // Predicated region
        $region13: #{tpu_custom_call.1} parent=11 // pred_check
          %p145 = pneg %p74
        $region14: #{tpu_custom_call.1} parent=11 // pred_check_branch
          %147 = sbr.rel (%p145) target = $region16
        $region15: #{tpu_custom_call.1} parent=11 // pred_region
          _
        $region16: #{tpu_custom_call.1} parent=11 // pred_fallthru
          _
      $region12: #{tpu_custom_call.1} parent=5 // pred_fallthru
        _
      %p148 = scmp.lt.s32.totalorder %s13, 2
      // Predicated region
      $region17: #{tpu_custom_call.1} parent=5 // pred_check
        %p149 = pneg %p148
      $region18: #{tpu_custom_call.1} parent=5 // pred_check_branch
        %151 = sbr.rel (%p149) target = $region20
      $region19: #{tpu_custom_call.1} parent=5 // pred_region
        // Predicated region
        $region21: #{tpu_custom_call.1} parent=19 // pred_check
          %p152 = pneg %p47
        $region22: #{tpu_custom_call.1} parent=19 // pred_check_branch
          %154 = sbr.rel (%p152) target = $region24
        $region23: #{tpu_custom_call.1} parent=19 // pred_region
          %s155 = sand.u32 %s37, 1
          %s156 = scalar_lea.sflag [#allocation3], %s155
          %s157 = sand.u32 %s37, 1
          %s158 = smul.addr %s157, 8
          %s159 = scalar_lea.vmem [#allocation2], %s158
          %s160 = smul.u32 2, %s21
          %s162 = ssub.s32 128, 128
          %163 = vsyncadd %s156, %s162
          %s164 = smul.addr %s20, 2
          %s165 = sadd.s32 %s160, %s164
          %s166 = smul.addr %s165, 64
          %s167 = scalar_lea.hbm %s0, %s166
          %s169 = sshll.u32 %s159, 4
          %s170 = int_to_ptr.vmem [resolvable:$true] %s169
          %172 = dma.hbm_to_vmem [thread:$0]  %s167, 128, %s170, %s156
        $region24: #{tpu_custom_call.1} parent=19 // pred_fallthru
          _
      $region20: #{tpu_custom_call.1} parent=5 // pred_fallthru
        _
      %p173 = scmp.le.s32.totalorder 1, %s13
      %p174 = scmp.lt.s32.totalorder %s13, 3
      %p175 = pnand %p173, %p174
      %p176 = pneg %p175
      // Predicated region
      $region25: #{tpu_custom_call.1} parent=5 // pred_check
        _
      $region26: #{tpu_custom_call.1} parent=5 // pred_check_branch
        %178 = sbr.rel (%p175) target = $region28
      $region27: #{tpu_custom_call.1} parent=5 // pred_region
        %s179 = ssub.s32 %s13, 1
        %s180 = sand.u32 %s40, 1
        %s181 = scalar_lea.sflag [#allocation3], %s180
        %s182 = sand.u32 %s40, 1
        %s183 = smul.addr %s182, 8
        %s184 = scalar_lea.vmem [#allocation2], %s183
        // Predicated region
        $region29: #{tpu_custom_call.1} parent=27 // pred_check
          %p185 = pneg %p53
        $region30: #{tpu_custom_call.1} parent=27 // pred_check_branch
          %187 = sbr.rel (%p185) target = $region32
        $region31: #{tpu_custom_call.1} parent=27 // pred_region
          %188 = dma.done %s181, 128
        $region32: #{tpu_custom_call.1} parent=27 // pred_fallthru
          _
        %s189 = sand.u32 %s40, 1
        %s190 = scalar_lea.sflag [#allocation3], %s189
        %s191 = sand.u32 %s40, 1
        %s192 = smul.addr %s191, 8
        %s193 = scalar_lea.vmem [#allocation2], %s192
        %p194 = pneg %p53
        %p195 = pneg %p50
        %p196 = pneg %p74
        %p197 = pneg %p71
        %p198 = pneg %p102
        %p199 = pneg %p99
        %p200 = scmp.lt.s32.totalorder %s22, 1
        %s201 = scalar_select %p200, %s22, 1
        %p202 = scmp.lt.s32.totalorder %s23, 0
        %s203 = scalar_select %p202, %s23, 0
        %s204 = sadd.s32 %s203, %s201
        %s205 = smul.addr %s204, 8
        %s206 = scalar_lea.vmem %s2, %s205
        %p207 = pneg %p130
        %p208 = pneg %p127
        %p209 = scmp.lt.s32.totalorder %s22, 1
        %s210 = scalar_select %p209, %s22, 1
        %p211 = scmp.lt.s32.totalorder %s23, 0
        %s212 = scalar_select %p211, %s23, 0
        %s213 = sadd.s32 %s212, %s210
        %s214 = smul.addr %s213, 8
        %s215 = scalar_lea.vmem %s3, %s214
        %s216 = smul.u32 2, %s23
        %p217 = scmp.lt.s32.totalorder %s22, 1
        %s218 = scalar_select %p217, %s22, 1
        %p219 = scmp.lt.s32.totalorder %s23, 0
        %s220 = scalar_select %p219, %s23, 0
        %s221 = sadd.s32 %s220, %s218
        %s222 = smul.addr %s221, 8
        %s223 = scalar_lea.vmem %s2, %s222
        %p224 = scmp.lt.s32.totalorder %s22, 1
        %s225 = scalar_select %p224, %s22, 1
        %p226 = scmp.lt.s32.totalorder %s23, 0
        %s227 = scalar_select %p226, %s23, 0
        %s228 = sadd.s32 %s227, %s225
        %s229 = smul.addr %s228, 8
        %s230 = scalar_lea.vmem %s3, %s229
        %v231 = vld [vmem:[%s1] sm:$0xff]
        %v232 = vld [vmem:[%s184] sm:$0xff]
        %v234 = vcombine.high %v232, %v232
        %vm235 = vcmask 31744
        %v237 = vsel %vm235, %v231, 0
        %vm239 = vcmask 1043456
        %v240 = vsel %vm239, %v232, 0
        %v242 = vsel %vm239, %v234, 0
        %244 = vmatprep.subr.mxu0 %v242
        %245 = vmatpush1.msra.mxu0 %v240
        %246 = vmatprep.subr.mxu0 0.0
        %247 = vmatpush1.msra.mxu0 0.0
        %248 = vmatprep.subr.mxu0 0.0
        %249 = vmatpush1.msra.mxu0 0.0
        %250 = vmatprep.subr.mxu0 0.0
        %251 = vmatpush1.msra.mxu0 0.0
        %252 = vmatprep.subr.mxu0 0.0
        %253 = vmatpush1.msra.mxu0 0.0
        %254 = vmatprep.subr.mxu0 0.0
        %255 = vmatpush1.msra.mxu0 0.0
        %256 = vmatprep.subr.mxu0 0.0
        %257 = vmatpush1.msra.mxu0 0.0
        %258 = vmatprep.subr.mxu0 0.0
        %259 = vmatpush1.msra.mxu0 0.0
        %260 = vmatprep.subr.mxu0 0.0
        %261 = vmatpush1.msra.mxu0 0.0
        %262 = vmatprep.subr.mxu0 0.0
        %263 = vmatpush1.msra.mxu0 0.0
        %264 = vmatprep.subr.mxu0 0.0
        %265 = vmatpush1.msra.mxu0 0.0
        %266 = vmatprep.subr.mxu0 0.0
        %267 = vmatpush1.msra.mxu0 0.0
        %268 = vmatprep.subr.mxu0 0.0
        %269 = vmatpush1.msra.mxu0 0.0
        %270 = vmatprep.subr.mxu0 0.0
        %271 = vmatpush1.msra.mxu0 0.0
        %272 = vmatprep.subr.mxu0 0.0
        %273 = vmatpush1.msra.mxu0 0.0
        %274 = vmatprep.subr.mxu0 0.0
        %275 = vmatpush1.msra.mxu0 0.0
        %276 = vmatprep.subr.mxu0 0.0
        %277 = vmatpush1.msra.mxu0 0.0
        %278 = vmatprep.subr.mxu0 0.0
        %279 = vmatpush1.msra.mxu0 0.0
        %280 = vmatprep.subr.mxu0 0.0
        %281 = vmatpush1.msra.mxu0 0.0
        %282 = vmatprep.subr.mxu0 0.0
        %283 = vmatpush1.msra.mxu0 0.0
        %284 = vmatprep.subr.mxu0 0.0
        %285 = vmatpush1.msra.mxu0 0.0
        %286 = vmatprep.subr.mxu0 0.0
        %287 = vmatpush1.msra.mxu0 0.0
        %288 = vmatprep.subr.mxu0 0.0
        %289 = vmatpush1.msra.mxu0 0.0
        %290 = vmatprep.subr.mxu0 0.0
        %291 = vmatpush1.msra.mxu0 0.0
        %292 = vmatprep.subr.mxu0 0.0
        %293 = vmatpush1.msra.mxu0 0.0
        %294 = vmatprep.subr.mxu0 0.0
        %295 = vmatpush1.msra.mxu0 0.0
        %296 = vmatprep.subr.mxu0 0.0
        %297 = vmatpush1.msra.mxu0 0.0
        %298 = vmatprep.subr.mxu0 0.0
        %299 = vmatpush1.msra.mxu0 0.0
        %300 = vmatprep.subr.mxu0 0.0
        %301 = vmatpush1.msra.mxu0 0.0
        %302 = vmatprep.subr.mxu0 0.0
        %303 = vmatpush1.msra.mxu0 0.0
        %304 = vmatprep.subr.mxu0 0.0
        %305 = vmatpush1.msra.mxu0 0.0
        %306 = vmatprep.subr.mxu0 0.0
        %307 = vmatpush1.msra.mxu0 0.0
        %308 = vmatprep.mubr.f32.mxu0 0.0
        %309 = vmatmul.mubr.f32.gmra.mrb[0].mxu0 %v237
        %v310 = vpop.f32.mrb[0].mxu0
        %v311 = vadd.f32 0.0, %v310
        %v312 = vpop.f32.mrb[0].mxu0
        %v313 = vadd.f32 0.0, %v312
        %314 = vdwg.mxu0
        %v315 = vadd.f32 %v311, %v313
        %316 = vadd.xlane.f32.xlu0 %v315
        %v317 = vpop.xlane.xlu0 %316
        %vm318 = vcmask 7168
        %319 = vst.msk [vmem:[%s223] sm:$0xff] %vm318, %v317
        %v320 = vmul.f32 %v311, %v311
        %v321 = vmul.f32 %v313, %v313
        %v322 = vadd.f32 %v320, %v321
        %323 = vadd.xlane.f32.xlu0 %v322
        %v324 = vpop.xlane.xlu0 %323
        %325 = vst.msk [vmem:[%s230] sm:$0xff] %vm318, %v324
        %p326 = scmp.lt.s32.totalorder %s22, 1
        %s327 = scalar_select %p326, %s22, 1
        %p328 = scmp.lt.s32.totalorder %s23, 0
        %s329 = scalar_select %p328, %s23, 0
        %s330 = sadd.s32 %s329, %s327
        %s331 = smul.addr %s330, 8
        %s332 = scalar_lea.vmem %s2, %s331
        %p333 = scmp.lt.s32.totalorder %s22, 1
        %s334 = scalar_select %p333, %s22, 1
        %p335 = scmp.lt.s32.totalorder %s23, 0
        %s336 = scalar_select %p335, %s23, 0
        %s337 = sadd.s32 %s336, %s334
        %s338 = smul.addr %s337, 8
        %s339 = scalar_lea.vmem %s3, %s338
        // Predicated region
        $region33: #{tpu_custom_call.1} parent=27 // pred_check
          %p340 = pneg %p99
        $region34: #{tpu_custom_call.1} parent=27 // pred_check_branch
          %342 = sbr.rel (%p340) target = $region36
        $region35: #{tpu_custom_call.1} parent=27 // pred_region
          _
        $region36: #{tpu_custom_call.1} parent=27 // pred_fallthru
          _
        // Predicated region
        $region37: #{tpu_custom_call.1} parent=27 // pred_check
          %p343 = pneg %p127
        $region38: #{tpu_custom_call.1} parent=27 // pred_check_branch
          %345 = sbr.rel (%p343) target = $region40
        $region39: #{tpu_custom_call.1} parent=27 // pred_region
          _
        $region40: #{tpu_custom_call.1} parent=27 // pred_fallthru
          _
      $region28: #{tpu_custom_call.1} parent=5 // pred_fallthru
        _
      %p346 = scmp.le.s32.totalorder 2, %s13
      // Predicated region
      $region41: #{tpu_custom_call.1} parent=5 // pred_check
        %p347 = pneg %p346
      $region42: #{tpu_custom_call.1} parent=5 // pred_check_branch
        %349 = sbr.rel (%p347) target = $region44
      $region43: #{tpu_custom_call.1} parent=5 // pred_region
        %s350 = ssub.s32 %s13, 2
        // Predicated region
        $region45: #{tpu_custom_call.1} parent=43 // pred_check
          %p351 = pneg %p105
        $region46: #{tpu_custom_call.1} parent=43 // pred_check_branch
          %353 = sbr.rel (%p351) target = $region48
        $region47: #{tpu_custom_call.1} parent=43 // pred_region
          %p354 = scmp.lt.s32.totalorder %s24, 1
          %s355 = scalar_select %p354, %s24, 1
          %p356 = scmp.lt.s32.totalorder %s25, 0
          %s357 = scalar_select %p356, %s25, 0
          %s358 = sadd.s32 %s357, %s355
          %s359 = smul.addr %s358, 8
          %s360 = scalar_lea.vmem %s2, %s359
        $region48: #{tpu_custom_call.1} parent=43 // pred_fallthru
          _
        // Predicated region
        $region49: #{tpu_custom_call.1} parent=43 // pred_check
          %p361 = pneg %p133
        $region50: #{tpu_custom_call.1} parent=43 // pred_check_branch
          %363 = sbr.rel (%p361) target = $region52
        $region51: #{tpu_custom_call.1} parent=43 // pred_region
          %p364 = scmp.lt.s32.totalorder %s24, 1
          %s365 = scalar_select %p364, %s24, 1
          %p366 = scmp.lt.s32.totalorder %s25, 0
          %s367 = scalar_select %p366, %s25, 0
          %s368 = sadd.s32 %s367, %s365
          %s369 = smul.addr %s368, 8
          %s370 = scalar_lea.vmem %s3, %s369
        $region52: #{tpu_custom_call.1} parent=43 // pred_fallthru
          _
      $region44: #{tpu_custom_call.1} parent=5 // pred_fallthru
        _
    $region6: #{tpu_custom_call.1} parent=1 // loop_footer
      %s17 = sadd.s32 1, %s13
    $region7: #{tpu_custom_call.1} parent=1 // loop_footer_branch
      %12 = sbr.rel target = $region3
    $region8: #{tpu_custom_call.1} parent=1 // loop_exit
      _
    %371 = vsyncpa [#allocation3], 1
    %s372 = scalar_lea.sflag [#allocation3], 1
    %373 = vsyncpa %s372, 1

</llo_original>
